<compile_context>
chip_gen: v5e
topology: v5e:2x2
jax: 0.10.0
libtpu: 0.0.40
codegen_flags: <defaults>
</compile_context>

<pallas_src>
import jax
import jax.numpy as jnp
from jax.experimental import pallas as pl
from jax.experimental.pallas import tpu as pltpu

_INV_255 = float(1.0 / 255.0)     # constant multiply (VALU) instead of divide (EUP+VALU)
_ROW_ALIGN = 32                   # satisfies sublane tiling for both uint8 (32) and f32 (8)
_MAX_LAST = 4096                  # cap on the 2-D view's last dim
_VMEM_BUDGET = 12 * 1024 * 1024   # double-buffered in+out stays under v5e's 16 MiB scoped VMEM


def _normalize_kernel(x_ref, o_ref):
    # Fused cast + scale on the VPU; kernel is HBM-bandwidth bound, so the
    # multiply is fully hidden under the DMAs.
    o_ref[...] = x_ref[...].astype(jnp.float32) * jnp.float32(_INV_255)


def _round_up(x, m):
    return -(-x // m) * m


def _round_down(x, m):
    return (x // m) * m


def _choose_last_dim(total):
    """Largest divisor of `total` (<= _MAX_LAST) used as the 2-D view's last dim.

    Prefers lane-exact divisors (multiples of 128) so every store is a full
    unmasked vst; otherwise falls back to the largest divisor, where only the
    final vreg per row is masked -- far cheaper than a whole-tensor pad+slice
    round trip through HBM.
    """
    best_any, best_128 = 1, 0
    d = 1
    while d * d <= total:
        if total % d == 0:
            for c in (d, total // d):
                if c <= _MAX_LAST:
                    if c > best_any:
                        best_any = c
                    if c % 128 == 0 and c > best_128:
                        best_128 = c
        d += 1
    return best_128 if best_128 else best_any


def _pick_tile_rows(rows, last, in_itemsize):
    """Rows per block: >= 2 tiles when possible (v7x dual-TC) within the VMEM budget."""
    if rows <= 2 * _ROW_ALIGN:
        return rows  # single full-extent block ("block dim == full array dim" exception)
    bytes_per_row = last * (4 + in_itemsize)          # f32 out + input, per row
    cap = _round_down(max(_VMEM_BUDGET // (2 * bytes_per_row), _ROW_ALIGN), _ROW_ALIGN)
    half = _round_up(pl.cdiv(rows, 2), _ROW_ALIGN)    # guarantees >= 2 grid steps
    return max(_ROW_ALIGN, min(cap, half))


def normalize_img(x: jax.Array) -> jax.Array:
    """Pallas equivalent of NormalizeImg.forward: x / 255.0 (float32 out).

    Accepts any input dtype (e.g. raw uint8 frames); the cast to float32 is
    fused into the kernel so the input is read from HBM exactly once in its
    original width, and no pad/slice copies happen outside the kernel.
    """
    # TODO(synk): the ultimate win is folding the 1/255 scale into the first
    # encoder conv (or emitting bf16 if the consumer runs in bf16) instead of
    # materializing a standalone f32 activation tensor in HBM.
    orig_shape = x.shape
    total = x.size
    in_itemsize = jnp.dtype(x.dtype).itemsize

    last = _choose_last_dim(total)
    rows = total // last
    x2d = x.reshape(rows, last)          # free bitcast: last divides total

    tile_m = _pick_tile_rows(rows, last, in_itemsize)
    grid = (pl.cdiv(rows, tile_m),)

    out2d = pl.pallas_call(
        _normalize_kernel,
        out_shape=jax.ShapeDtypeStruct((rows, last), jnp.float32),
        grid_spec=pl.GridSpec(
            grid=grid,
            in_specs=[pl.BlockSpec((tile_m, last), lambda i: (i, 0))],
            out_specs=pl.BlockSpec((tile_m, last), lambda i: (i, 0)),
        ),
        compiler_params=pltpu.CompilerParams(
            # Tiles are independent; lets v7x shard the loop across both TCs.
            dimension_semantics=("parallel",),
        ),
        cost_estimate=pl.CostEstimate(
            flops=total,
            transcendentals=0,
            bytes_accessed=total * (in_itemsize + 4),
        ),
    )(x2d)

    return out2d.reshape(orig_shape)


if __name__ == "__main__":
    k0, k1, k2 = jax.random.split(jax.random.PRNGKey(0), 3)

    # Realistic DrQ-v2 style input: uint8 image frames, NCHW layout
    # (total = 2048, exercises the lane-exact path).
    x_u8 = jax.random.randint(
        k0, (2, 4, 16, 16), 0, 256, dtype=jnp.int32
    ).astype(jnp.uint8)
    out_u8 = jax.block_until_ready(normalize_img(x_u8))
    ref_u8 = x_u8.astype(jnp.float32) / 255.0
    assert out_u8.shape == ref_u8.shape and out_u8.dtype == jnp.float32
    assert float(jnp.max(jnp.abs(out_u8 - ref_u8))) < 1e-5

    # Float32 input path (matches the PyTorch `tensor / 255.0` semantics).
    x_f32 = jax.random.uniform(
        k1, (2, 4, 16, 16), dtype=jnp.float32, minval=0.0, maxval=255.0
    )
    out_f32 = jax.block_until_ready(normalize_img(x_f32))
    ref_f32 = x_f32 / 255.0
    assert out_f32.shape == ref_f32.shape and out_f32.dtype == jnp.float32
    assert float(jnp.max(jnp.abs(out_f32 - ref_f32))) < 1e-5

    # DrQ-v2-like shape whose size is NOT a multiple of 128 (2*9*21*21 = 7938):
    # exercises the no-pad fallback path with a masked lane tail.
    x_odd = jax.random.randint(
        k2, (2, 9, 21, 21), 0, 256, dtype=jnp.int32
    ).astype(jnp.uint8)
    out_odd = jax.block_until_ready(normalize_img(x_odd))
    ref_odd = x_odd.astype(jnp.float32) / 255.0
    assert out_odd.shape == ref_odd.shape and out_odd.dtype == jnp.float32
    assert float(jnp.max(jnp.abs(out_odd - ref_odd))) < 1e-5

    print("KERNEL_OK")
</pallas_src>

<mosaic_0001>
module attributes {stable_mosaic.version = 11 : i64} {
  func.func @_normalize_kernel(%arg0: i32, %arg1: memref<1x2048xi8, #tpu.memory_space<vmem>>, %arg2: memref<1x2048xf32, #tpu.memory_space<vmem>>) attributes {dimension_semantics = [#tpu.dimension_semantics<parallel>], iteration_bounds = array<i64: 1>, scalar_prefetch = 0 : i64, scratch_operands = 0 : i64, tpu.core_type = #tpu.core_type<tc>, window_params = [{transform_indices = @transform_0, window_bounds = array<i64: 1, 2048>}, {transform_indices = @transform_1, window_bounds = array<i64: 1, 2048>}]} {
    %c0 = arith.constant 0 : index
    %c0_0 = arith.constant 0 : index
    %0 = vector.load %arg1[%c0, %c0_0] : memref<1x2048xi8, #tpu.memory_space<vmem>>, vector<1x2048xi8>
    %1 = arith.uitofp %0 : vector<1x2048xi8> to vector<1x2048xf32>
    %cst = arith.constant 0.00392156886 : f32
    %2 = vector.broadcast %cst : f32 to vector<1x2048xf32>
    %3 = arith.mulf %1, %2 : vector<1x2048xf32>
    %c0_1 = arith.constant 0 : index
    %c0_2 = arith.constant 0 : index
    %4 = vector.load %arg2[%c0_1, %c0_2] : memref<1x2048xf32, #tpu.memory_space<vmem>>, vector<1x2048xf32>
    tpu.vector_store %arg2[%c0_1, %c0_2], %3 {strides = array<i32>} : memref<1x2048xf32, #tpu.memory_space<vmem>>, vector<1x2048xf32>,
    return
  }
  func.func @transform_0(%arg0: i32) -> (i32, i32) {
    %c0_i32 = arith.constant 0 : i32
    %c0_i32_0 = arith.constant 0 : i32
    return %arg0, %c0_i32 : i32, i32
  }
  func.func @transform_1(%arg0: i32) -> (i32, i32) {
    %c0_i32 = arith.constant 0 : i32
    %c0_i32_0 = arith.constant 0 : i32
    return %arg0, %c0_i32 : i32, i32
  }
}

</mosaic_0001>

<llo_original>
// kernel: tpu_custom_call.1
$region0: #{tpu_custom_call.1}
  #allocation0 [shape = 'u32[]', space=smem, size = 0x4, offset = 0x4, fixed_abs, tag = 'smem constant byte address 0x4 - core index']
  #allocation1 [shape = 'u32[72,128]{1,0:T(1,128)}', space=vmem, size = 0x9000, scoped, tag = 'internal scratch']
  %s0 = inlined_call_operand.hbm [shape: u8[1,2048], index: 0, kind: input, shape index: {}]
  %s1 = inlined_call_operand.hbm [shape: f32[1,2048], index: 1, kind: output, shape index: {}]
  %s2 = sld [smem:[#allocation0]]
  $region18: #{tpu_custom_call.1} parent=0
    _
  %s4 = ssub.s32 1, %s2
  %s5 = scalar_select 0, %s4, %s2
  $region1: #{tpu_custom_call.1} parent=0
    #allocation2 [shape = 'u8[8192]{0}', space=vmem, size = 0x2000, scoped, tag = 'input window, operand 0, single buffered']
    #allocation3 [shape = 's32[1]{0}', space=sflag, size = 0x4, scoped, tag = 'scoped memory for tpu_custom_call.1']
    #allocation4 [shape = 's32[1]{0}', space=sflag, size = 0x4, scoped, tag = 'scoped memory for tpu_custom_call.1']
    #allocation5 [shape = 'u8[8192]{0}', space=vmem, size = 0x2000, scoped, tag = 'output window, operand 0, single buffered']
    %6 = vsyncpa [#allocation3], 0
    %7 = vsyncpa [#allocation4], 0
    // Predicated region
    $region2: #{tpu_custom_call.1} parent=1 // pred_check
      _
    $region3: #{tpu_custom_call.1} parent=1 // pred_check_branch
      %9 = sbr.rel (0) target = $region5
    $region4: #{tpu_custom_call.1} parent=1 // pred_region
      %11 = vsyncadd [#allocation3], 0
      %s13 = sshll.u32 %s0, 4
      %s14 = int_to_ptr.hbm [resolvable:$true] %s13
      %s15 = sshll.u32 [#allocation2], 4
      %s16 = int_to_ptr.vmem [resolvable:$true] %s15
      %18 = dma.hbm_to_vmem [thread:$0]  %s14, 256, %s16, [#allocation3]
    $region5: #{tpu_custom_call.1} parent=1 // pred_fallthru
      _
    // Predicated region
    $region6: #{tpu_custom_call.1} parent=1 // pred_check
      _
    $region7: #{tpu_custom_call.1} parent=1 // pred_check_branch
      %20 = sbr.rel (0) target = $region9
    $region8: #{tpu_custom_call.1} parent=1 // pred_region
      %22 = dma.done [#allocation3], 256
    $region9: #{tpu_custom_call.1} parent=1 // pred_fallthru
      _
    %v23 = vld [vmem:[#allocation2] sm:$0xff]
    %v24 = vld [vmem:[#allocation2 + $0x8] sm:$0xff]
    %v25 = vunpack.c.0.s8 %v23
    %v26 = vunpack.c.1.s8 %v23
    %v27 = vunpack.c.2.s8 %v23
    %v28 = vunpack.c.3.s8 %v23
    %v29 = vunpack.c.0.s8 %v24
    %v30 = vunpack.c.1.s8 %v24
    %v31 = vunpack.c.2.s8 %v24
    %v32 = vunpack.c.3.s8 %v24
    %v33 = vand.u32 %v25, 255
    %v34 = vand.u32 %v26, 255
    %v35 = vand.u32 %v27, 255
    %v36 = vand.u32 %v28, 255
    %v37 = vand.u32 %v29, 255
    %v38 = vand.u32 %v30, 255
    %v39 = vand.u32 %v31, 255
    %v40 = vand.u32 %v32, 255
    %v41 = vcvt.s32.f32 %v33
    %v42 = vcvt.s32.f32 %v34
    %v43 = vcvt.s32.f32 %v35
    %v44 = vcvt.s32.f32 %v36
    %v45 = vcvt.s32.f32 %v37
    %v46 = vcvt.s32.f32 %v38
    %v47 = vcvt.s32.f32 %v39
    %v48 = vcvt.s32.f32 %v40
    %v49 = vmul.f32 %v41, 0.003921569
    %v50 = vmul.f32 %v42, 0.003921569
    %v51 = vmul.f32 %v43, 0.003921569
    %v52 = vmul.f32 %v44, 0.003921569
    %v53 = vmul.f32 %v45, 0.003921569
    %v54 = vmul.f32 %v46, 0.003921569
    %v55 = vmul.f32 %v47, 0.003921569
    %v56 = vmul.f32 %v48, 0.003921569
    %v65 = vrot.slane %v49, 3
    %v66 = vrot.slane %v50, 6
    %v67 = vrot.slane %v50, 1
    %v68 = vrot.slane %v51, 4
    %v69 = vrot.slane %v51, 7
    %v70 = vrot.slane %v52, 2
    %v71 = vrot.slane %v52, 5
    %v72 = vrot.slane %v53, 3
    %v73 = vrot.slane %v54, 6
    %v74 = vrot.slane %v54, 1
    %v75 = vrot.slane %v55, 4
    %v76 = vrot.slane %v55, 7
    %v77 = vrot.slane %v56, 2
    %v78 = vrot.slane %v56, 5
    %vm79 = vcmask 1040384
    %v80 = vsel %vm79, %v49, %v65
    %vm81 = vcmask 1042434
    %v82 = vsel %vm81, %v66, %v67
    %vm83 = vcmask 1041408
    %v84 = vsel %vm83, %v80, %v82
    %vm85 = vcmask 1044484
    %v86 = vsel %vm85, %v68, %v69
    %vm87 = vcmask 1046534
    %v88 = vsel %vm87, %v70, %v71
    %vm89 = vcmask 1045508
    %v90 = vsel %vm89, %v86, %v88
    %vm91 = vcmask 1043456
    %v92 = vsel %vm91, %v84, %v90
    %v93 = vsel %vm79, %v53, %v72
    %v94 = vsel %vm81, %v73, %v74
    %v95 = vsel %vm83, %v93, %v94
    %v96 = vsel %vm85, %v75, %v76
    %v97 = vsel %vm87, %v77, %v78
    %v98 = vsel %vm89, %v96, %v97
    %v99 = vsel %vm91, %v95, %v98
    %102 = vst [vmem:[#allocation5] sm:$0xff] %v92
    %103 = vst [vmem:[#allocation5 + $0x8] sm:$0xff] %v99
    // Predicated region
    $region10: #{tpu_custom_call.1} parent=1 // pred_check
      _
    $region11: #{tpu_custom_call.1} parent=1 // pred_check_branch
      %105 = sbr.rel (0) target = $region13
    $region12: #{tpu_custom_call.1} parent=1 // pred_region
      %107 = vsyncadd [#allocation4], 0
      %s109 = sshll.u32 [#allocation5], 4
      %s110 = int_to_ptr.vmem [resolvable:$true] %s109
      %s111 = sshll.u32 %s1, 4
      %s112 = int_to_ptr.hbm [resolvable:$true] %s111
      %114 = dma.vmem_to_hbm [thread:$0]  %s110, 256, %s112, [#allocation4]
    $region13: #{tpu_custom_call.1} parent=1 // pred_fallthru
      _
    // Predicated region
    $region14: #{tpu_custom_call.1} parent=1 // pred_check
      _
    $region15: #{tpu_custom_call.1} parent=1 // pred_check_branch
      %116 = sbr.rel (0) target = $region17
    $region16: #{tpu_custom_call.1} parent=1 // pred_region
      %118 = dma.done [#allocation4], 256
    $region17: #{tpu_custom_call.1} parent=1 // pred_fallthru
      _
    %119 = vsyncpa [#allocation3], 1
    %120 = vsyncpa [#allocation4], 1

</llo_original>
